<compile_context>
chip_gen: v5e
topology: v5e:2x2
jax: 0.10.0
libtpu: 0.0.40
codegen_flags: <defaults>
</compile_context>

<pallas_src>
import functools

import jax
import jax.numpy as jnp
from jax.experimental import pallas as pl
from jax.experimental.pallas import tpu as pltpu

LANES = 128
DEFAULT_BLOCK_ROWS = 4096   # 4096x128 f32 block = 2 MiB; 2 in x 2 buf = 8 MiB VMEM


def _round_up(x, m):
    return ((x + m - 1) // m) * m


def _num_core_slices():
    # Two TensorCores per chip only on v7x; on single-TC chips (v5e/v6e) a
    # second "parallel" slice is just a serial outer loop plus duplicate-block
    # DMA/compute waste, so keep it at 1 there.
    try:
        kind = jax.devices()[0].device_kind.lower()
    except Exception:
        return 1
    return 2 if "v7" in kind else 1


def _bce_kernel(pred_ref, target_ref, out_ref, *,
                rows, block_rows, blocks_per_slice,
                label_smoothing, pos_weight, neg_weight):
    c = pl.program_id(0)   # core-slice axis ("parallel")
    i = pl.program_id(1)   # block axis within the slice ("arbitrary")

    @pl.when(i == 0)
    def _():
        out_ref[...] = jnp.zeros_like(out_ref)

    def inner():
        # Native-dtype loads (bf16 stays bf16 in HBM); math in f32.
        p = pred_ref[...].astype(jnp.float32)
        t = target_ref[...].astype(jnp.float32)
        # pred = clamp(pred, 0.0, 0.999)
        p = jnp.clip(p, 0.0, 0.999)
        # PyTorch BCE clamps log at -100; the log(1-p) clamp is provably dead
        # because 1-p >= 1e-3 after the clip, so it is dropped.
        log_p = jnp.maximum(jnp.log(p), -100.0)
        log_1mp = jnp.log(1.0 - p)
        # ts = t*(1-ls) + 0.5*ls ; w = t*(pos_w - neg_w) + neg_w
        # value = w * (ts*log p + (1-ts)*log(1-p))  (the NEGATIVE of the loss;
        # the sign and 1/n are folded into the wrapper epilogue).
        if label_smoothing != 0.0:
            ts = t * (1.0 - label_smoothing) + (0.5 * label_smoothing)
        else:
            ts = t
        v = ts * (log_p - log_1mp) + log_1mp
        if pos_weight != 1.0 or neg_weight != 1.0:
            w = t * (pos_weight - neg_weight) + neg_weight
            v = w * v
        return v

    def accum(v):
        # (8,128) vector partial sums: pure VPU adds, no cross-lane work.
        out_ref[...] += v.reshape(block_rows // 8, 8, LANES).sum(axis=0)

    gb = c * blocks_per_slice + i          # unclamped global block id
    rem = rows - gb * block_rows           # number of valid rows in this block

    # Interior blocks: mask-free fast path (the overwhelming majority).
    @pl.when(rem >= block_rows)
    def _():
        accum(inner())

    # Ragged last block (garbage rows past the array edge) and any clamped
    # duplicate block of the second core-slice (rem <= 0): row-masked path.
    # jnp.where (not multiply) so garbage/NaN data cannot leak into the sum.
    @pl.when(rem < block_rows)
    def _():
        v = inner()
        row = jax.lax.broadcasted_iota(jnp.int32, v.shape, 0)
        accum(jnp.where(row < rem, v, 0.0))


def _inner_sum(p, t, label_smoothing, pos_weight, neg_weight):
    # Same math as the kernel (negative of the loss), for the <128-element
    # ragged tail handled in plain JAX.
    p = jnp.clip(p.astype(jnp.float32), 0.0, 0.999)
    t = t.astype(jnp.float32)
    log_p = jnp.maximum(jnp.log(p), -100.0)
    log_1mp = jnp.log(1.0 - p)
    ts = t * (1.0 - label_smoothing) + 0.5 * label_smoothing
    w = t * (pos_weight - neg_weight) + neg_weight
    return jnp.sum(w * (ts * (log_p - log_1mp) + log_1mp))


def insight_train_loss(pred, target, *, label_smoothing=0.0, pos_weight=1.0,
                       neg_weight=1.0):
    assert 0.0 <= label_smoothing < 1.0
    assert pred.shape == target.shape
    n = pred.size
    assert n > 0

    # Keep floating inputs in their native dtype (bf16 halves HBM traffic);
    # promote non-float inputs once.
    if not jnp.issubdtype(pred.dtype, jnp.floating):
        pred = pred.astype(jnp.float32)
    if not jnp.issubdtype(target.dtype, jnp.floating):
        target = target.astype(jnp.float32)

    pred_f = jnp.ravel(pred)
    target_f = jnp.ravel(target)

    rows = n // LANES
    n_main = rows * LANES
    tail = n - n_main

    total = jnp.float32(0.0)

    if tail:
        # Sub-128 ragged tail: negligible work, done in plain JAX so the bulk
        # never needs a padded full-array copy.
        total = total + _inner_sum(pred_f[n_main:], target_f[n_main:],
                                   label_smoothing, pos_weight, neg_weight)

    if rows > 0:
        if tail:
            pred2 = pred_f[:n_main].reshape(rows, LANES)
            target2 = target_f[:n_main].reshape(rows, LANES)
        else:
            pred2 = pred_f.reshape(rows, LANES)
            target2 = target_f.reshape(rows, LANES)

        # Sublane granularity: 8 rows for 4-byte dtypes, 16 for 2-byte (bf16).
        min_itemsize = min(pred2.dtype.itemsize, target2.dtype.itemsize)
        min_sub = 8 if min_itemsize >= 4 else 16
        block_rows = min(DEFAULT_BLOCK_ROWS, _round_up(rows, min_sub))

        total_blocks = pl.cdiv(rows, block_rows)
        num_slices = max(1, min(_num_core_slices(), total_blocks))
        blocks_per_slice = pl.cdiv(total_blocks, num_slices)
        last_block = total_blocks - 1

        def in_map(c, i):
            # Clamp fully out-of-range block ids (possible when total_blocks
            # is odd and num_slices == 2) to a valid block; the kernel's
            # row-remainder mask zeroes their contribution.
            return (jnp.minimum(c * blocks_per_slice + i, last_block), 0)

        kernel = functools.partial(
            _bce_kernel,
            rows=rows, block_rows=block_rows,
            blocks_per_slice=blocks_per_slice,
            label_smoothing=float(label_smoothing),
            pos_weight=float(pos_weight), neg_weight=float(neg_weight))

        # TODO(synk): verify on v7x (xprof / bundle dump) that the leading
        # "parallel" axis really shards the row blocks across both
        # TensorCores; if not, switch to pltpu.CORE_PARALLEL / pl.core_map.
        partials = pl.pallas_call(
            kernel,
            out_shape=jax.ShapeDtypeStruct((num_slices * 8, LANES),
                                           jnp.float32),
            grid_spec=pltpu.PrefetchScalarGridSpec(
                num_scalar_prefetch=0,
                grid=(num_slices, blocks_per_slice),
                in_specs=[pl.BlockSpec((block_rows, LANES), in_map),
                          pl.BlockSpec((block_rows, LANES), in_map)],
                out_specs=pl.BlockSpec((8, LANES), lambda c, i: (c, 0)),
            ),
            compiler_params=pltpu.CompilerParams(
                dimension_semantics=("parallel", "arbitrary")),
        )(pred2, target2)

        total = total + jnp.sum(partials)

    # total is the sum of w*(ts*log p + (1-ts)*log(1-p)); mean BCE = -total/n.
    return -total / jnp.float32(n)


def _reference(pred, target, label_smoothing, pos_weight, neg_weight):
    # Pure-JAX reference mirroring the PyTorch forward.
    p = jnp.clip(pred.astype(jnp.float32), 0.0, 0.999)
    t = target.astype(jnp.float32)
    ts = t * (1.0 - label_smoothing) + 0.5 * label_smoothing
    w = t * (pos_weight - 1.0) + (1.0 - t) * (neg_weight - 1.0) + 1.0
    log_p = jnp.maximum(jnp.log(p), -100.0)
    log_1mp = jnp.maximum(jnp.log(1.0 - p), -100.0)
    return jnp.mean(-w * (ts * log_p + (1.0 - ts) * log_1mp))


if __name__ == "__main__":
    key = jax.random.PRNGKey(0)
    k1, k2, k3, k4 = jax.random.split(key, 4)

    ls, pw, nw = 0.1, 2.0, 0.5

    # Primary check: NCHW-like f32 prediction/target maps (128-aligned).
    shape = (2, 4, 16, 16)
    pred = jax.random.uniform(k1, shape, dtype=jnp.float32)
    target = jax.random.bernoulli(k2, p=0.3, shape=shape).astype(jnp.float32)

    loss = insight_train_loss(pred, target, label_smoothing=ls,
                              pos_weight=pw, neg_weight=nw)
    loss = jax.block_until_ready(loss)
    ref = _reference(pred, target, ls, pw, nw)
    assert jnp.allclose(loss, ref, rtol=1e-5, atol=1e-5), (loss, ref)

    # Secondary check: ragged element count + native bf16 inputs (exercises
    # the masked last block, the JAX tail path, and the native-dtype path).
    shape2 = (3, 5, 7, 11)  # 1155 elements, not a multiple of 128
    pred2 = jax.random.uniform(k3, shape2, dtype=jnp.float32).astype(jnp.bfloat16)
    target2 = jax.random.bernoulli(k4, p=0.5, shape=shape2).astype(jnp.bfloat16)

    loss2 = insight_train_loss(pred2, target2, label_smoothing=0.0,
                               pos_weight=1.0, neg_weight=1.0)
    loss2 = jax.block_until_ready(loss2)
    ref2 = _reference(pred2, target2, 0.0, 1.0, 1.0)
    assert jnp.allclose(loss2, ref2, rtol=1e-4, atol=1e-5), (loss2, ref2)

    print("KERNEL_OK")
</pallas_src>

<mosaic_0001>
module attributes {stable_mosaic.version = 11 : i64} {
  func.func @_bce_kernel(%arg0: i32, %arg1: i32, %arg2: memref<16x128xf32, #tpu.memory_space<vmem>>, %arg3: memref<16x128xf32, #tpu.memory_space<vmem>>, %arg4: memref<8x128xf32, #tpu.memory_space<vmem>>) attributes {dimension_semantics = [#tpu.dimension_semantics<parallel>, #tpu.dimension_semantics<arbitrary>], iteration_bounds = array<i64: 1, 1>, scalar_prefetch = 0 : i64, scratch_operands = 0 : i64, tpu.core_type = #tpu.core_type<tc>, window_params = [{transform_indices = @transform_0, window_bounds = array<i64: 16, 128>}, {transform_indices = @transform_1, window_bounds = array<i64: 16, 128>}, {transform_indices = @transform_2, window_bounds = array<i64: 8, 128>}]} {
    %c0_i32 = arith.constant 0 : i32
    %0 = arith.cmpi eq, %arg1, %c0_i32 : i32
    %1 = arith.extui %0 : i1 to i32
    %c0_i32_0 = arith.constant 0 : i32
    %2 = arith.cmpi ne, %1, %c0_i32_0 : i32
    scf.if %2 {
      %cst = arith.constant 0.000000e+00 : f32
      %13 = vector.broadcast %cst : f32 to vector<8x128xf32>
      %c0 = arith.constant 0 : index
      %c0_6 = arith.constant 0 : index
      %14 = vector.load %arg4[%c0, %c0_6] : memref<8x128xf32, #tpu.memory_space<vmem>>, vector<8x128xf32>
      tpu.vector_store %arg4[%c0, %c0_6], %13 {strides = array<i32>} : memref<8x128xf32, #tpu.memory_space<vmem>>, vector<8x128xf32>,
    } else {
    }
    %c1_i32 = arith.constant 1 : i32
    %3 = arith.muli %arg0, %c1_i32 : i32
    %4 = arith.addi %3, %arg1 : i32
    %c16_i32 = arith.constant 16 : i32
    %5 = arith.muli %4, %c16_i32 : i32
    %c16_i32_1 = arith.constant 16 : i32
    %6 = arith.subi %c16_i32_1, %5 : i32
    %c16_i32_2 = arith.constant 16 : i32
    %7 = arith.cmpi sge, %6, %c16_i32_2 : i32
    %8 = arith.extui %7 : i1 to i32
    %c0_i32_3 = arith.constant 0 : i32
    %9 = arith.cmpi ne, %8, %c0_i32_3 : i32
    scf.if %9 {
      %c0 = arith.constant 0 : index
      %c0_6 = arith.constant 0 : index
      %13 = vector.load %arg2[%c0, %c0_6] : memref<16x128xf32, #tpu.memory_space<vmem>>, vector<16x128xf32>
      %c0_7 = arith.constant 0 : index
      %c0_8 = arith.constant 0 : index
      %14 = vector.load %arg3[%c0_7, %c0_8] : memref<16x128xf32, #tpu.memory_space<vmem>>, vector<16x128xf32>
      %cst = arith.constant 0.000000e+00 : f32
      %cst_9 = arith.constant 9.990000e-01 : f32
      %15 = vector.broadcast %cst : f32 to vector<16x128xf32>
      %16 = arith.maximumf %15, %13 : vector<16x128xf32>
      %17 = vector.broadcast %cst_9 : f32 to vector<16x128xf32>
      %18 = arith.minimumf %17, %16 : vector<16x128xf32>
      %19 = math.log %18 : vector<16x128xf32>
      %cst_10 = arith.constant -1.000000e+02 : f32
      %20 = vector.broadcast %cst_10 : f32 to vector<16x128xf32>
      %21 = arith.maximumf %19, %20 : vector<16x128xf32>
      %cst_11 = arith.constant 1.000000e+00 : f32
      %22 = vector.broadcast %cst_11 : f32 to vector<16x128xf32>
      %23 = arith.subf %22, %18 : vector<16x128xf32>
      %24 = math.log %23 : vector<16x128xf32>
      %cst_12 = arith.constant 0.899999976 : f32
      %25 = vector.broadcast %cst_12 : f32 to vector<16x128xf32>
      %26 = arith.mulf %14, %25 : vector<16x128xf32>
      %cst_13 = arith.constant 5.000000e-02 : f32
      %27 = vector.broadcast %cst_13 : f32 to vector<16x128xf32>
      %28 = arith.addf %26, %27 : vector<16x128xf32>
      %29 = arith.subf %21, %24 : vector<16x128xf32>
      %30 = arith.mulf %28, %29 : vector<16x128xf32>
      %31 = arith.addf %30, %24 : vector<16x128xf32>
      %cst_14 = arith.constant 1.500000e+00 : f32
      %32 = vector.broadcast %cst_14 : f32 to vector<16x128xf32>
      %33 = arith.mulf %14, %32 : vector<16x128xf32>
      %cst_15 = arith.constant 5.000000e-01 : f32
      %34 = vector.broadcast %cst_15 : f32 to vector<16x128xf32>
      %35 = arith.addf %33, %34 : vector<16x128xf32>
      %36 = arith.mulf %35, %31 : vector<16x128xf32>
      %c0_16 = arith.constant 0 : index
      %c0_17 = arith.constant 0 : index
      %37 = vector.load %arg4[%c0_16, %c0_17] : memref<8x128xf32, #tpu.memory_space<vmem>>, vector<8x128xf32>
      %38 = vector.shape_cast %36 : vector<16x128xf32> to vector<2x8x128xf32>
      %cst_18 = arith.constant dense<0.000000e+00> : vector<8x128xf32>
      %39 = vector.multi_reduction <add>, %38, %cst_18 [0] : vector<2x8x128xf32> to vector<8x128xf32>
      %40 = arith.addf %37, %39 : vector<8x128xf32>
      %c0_19 = arith.constant 0 : index
      %c0_20 = arith.constant 0 : index
      %41 = vector.load %arg4[%c0_19, %c0_20] : memref<8x128xf32, #tpu.memory_space<vmem>>, vector<8x128xf32>
      tpu.vector_store %arg4[%c0_19, %c0_20], %40 {strides = array<i32>} : memref<8x128xf32, #tpu.memory_space<vmem>>, vector<8x128xf32>,
    } else {
    }
    %c16_i32_4 = arith.constant 16 : i32
    %10 = arith.cmpi slt, %6, %c16_i32_4 : i32
    %11 = arith.extui %10 : i1 to i32
    %c0_i32_5 = arith.constant 0 : i32
    %12 = arith.cmpi ne, %11, %c0_i32_5 : i32
    scf.if %12 {
      %c0 = arith.constant 0 : index
      %c0_6 = arith.constant 0 : index
      %13 = vector.load %arg2[%c0, %c0_6] : memref<16x128xf32, #tpu.memory_space<vmem>>, vector<16x128xf32>
      %c0_7 = arith.constant 0 : index
      %c0_8 = arith.constant 0 : index
      %14 = vector.load %arg3[%c0_7, %c0_8] : memref<16x128xf32, #tpu.memory_space<vmem>>, vector<16x128xf32>
      %cst = arith.constant 0.000000e+00 : f32
      %cst_9 = arith.constant 9.990000e-01 : f32
      %15 = vector.broadcast %cst : f32 to vector<16x128xf32>
      %16 = arith.maximumf %15, %13 : vector<16x128xf32>
      %17 = vector.broadcast %cst_9 : f32 to vector<16x128xf32>
      %18 = arith.minimumf %17, %16 : vector<16x128xf32>
      %19 = math.log %18 : vector<16x128xf32>
      %cst_10 = arith.constant -1.000000e+02 : f32
      %20 = vector.broadcast %cst_10 : f32 to vector<16x128xf32>
      %21 = arith.maximumf %19, %20 : vector<16x128xf32>
      %cst_11 = arith.constant 1.000000e+00 : f32
      %22 = vector.broadcast %cst_11 : f32 to vector<16x128xf32>
      %23 = arith.subf %22, %18 : vector<16x128xf32>
      %24 = math.log %23 : vector<16x128xf32>
      %cst_12 = arith.constant 0.899999976 : f32
      %25 = vector.broadcast %cst_12 : f32 to vector<16x128xf32>
      %26 = arith.mulf %14, %25 : vector<16x128xf32>
      %cst_13 = arith.constant 5.000000e-02 : f32
      %27 = vector.broadcast %cst_13 : f32 to vector<16x128xf32>
      %28 = arith.addf %26, %27 : vector<16x128xf32>
      %29 = arith.subf %21, %24 : vector<16x128xf32>
      %30 = arith.mulf %28, %29 : vector<16x128xf32>
      %31 = arith.addf %30, %24 : vector<16x128xf32>
      %cst_14 = arith.constant 1.500000e+00 : f32
      %32 = vector.broadcast %cst_14 : f32 to vector<16x128xf32>
      %33 = arith.mulf %14, %32 : vector<16x128xf32>
      %cst_15 = arith.constant 5.000000e-01 : f32
      %34 = vector.broadcast %cst_15 : f32 to vector<16x128xf32>
      %35 = arith.addf %33, %34 : vector<16x128xf32>
      %36 = arith.mulf %35, %31 : vector<16x128xf32>
      %37 = tpu.iota {dimensions = array<i32: 0>} : vector<16x128xi32>
      %38 = vector.broadcast %6 : i32 to vector<16x128xi32>
      %39 = arith.cmpi slt, %37, %38 : vector<16x128xi32>
      %cst_16 = arith.constant 0.000000e+00 : f32
      %40 = vector.broadcast %cst_16 : f32 to vector<16x128xf32>
      %41 = arith.select %39, %36, %40 : vector<16x128xi1>, vector<16x128xf32>
      %c0_17 = arith.constant 0 : index
      %c0_18 = arith.constant 0 : index
      %42 = vector.load %arg4[%c0_17, %c0_18] : memref<8x128xf32, #tpu.memory_space<vmem>>, vector<8x128xf32>
      %43 = vector.shape_cast %41 : vector<16x128xf32> to vector<2x8x128xf32>
      %cst_19 = arith.constant dense<0.000000e+00> : vector<8x128xf32>
      %44 = vector.multi_reduction <add>, %43, %cst_19 [0] : vector<2x8x128xf32> to vector<8x128xf32>
      %45 = arith.addf %42, %44 : vector<8x128xf32>
      %c0_20 = arith.constant 0 : index
      %c0_21 = arith.constant 0 : index
      %46 = vector.load %arg4[%c0_20, %c0_21] : memref<8x128xf32, #tpu.memory_space<vmem>>, vector<8x128xf32>
      tpu.vector_store %arg4[%c0_20, %c0_21], %45 {strides = array<i32>} : memref<8x128xf32, #tpu.memory_space<vmem>>, vector<8x128xf32>,
    } else {
    }
    return
  }
  func.func @transform_0(%arg0: i32, %arg1: i32) -> (i32, i32) {
    %c1_i32 = arith.constant 1 : i32
    %0 = arith.muli %arg0, %c1_i32 : i32
    %1 = arith.addi %0, %arg1 : i32
    %c0_i32 = arith.constant 0 : i32
    %2 = arith.minsi %1, %c0_i32 : i32
    %c0_i32_0 = arith.constant 0 : i32
    %c0_i32_1 = arith.constant 0 : i32
    return %2, %c0_i32_0 : i32, i32
  }
  func.func @transform_1(%arg0: i32, %arg1: i32) -> (i32, i32) {
    %c1_i32 = arith.constant 1 : i32
    %0 = arith.muli %arg0, %c1_i32 : i32
    %1 = arith.addi %0, %arg1 : i32
    %c0_i32 = arith.constant 0 : i32
    %2 = arith.minsi %1, %c0_i32 : i32
    %c0_i32_0 = arith.constant 0 : i32
    %c0_i32_1 = arith.constant 0 : i32
    return %2, %c0_i32_0 : i32, i32
  }
  func.func @transform_2(%arg0: i32, %arg1: i32) -> (i32, i32) {
    %c0_i32 = arith.constant 0 : i32
    %c0_i32_0 = arith.constant 0 : i32
    return %arg0, %c0_i32 : i32, i32
  }
}

</mosaic_0001>

<llo_original>
// kernel: tpu_custom_call.1
$region0: #{tpu_custom_call.1}
  #allocation0 [shape = 'u32[]', space=smem, size = 0x4, offset = 0x4, fixed_abs, tag = 'smem constant byte address 0x4 - core index']
  #allocation1 [shape = 'u32[72,128]{1,0:T(1,128)}', space=vmem, size = 0x9000, scoped, tag = 'internal scratch']
  %s0 = inlined_call_operand.hbm [shape: f32[16,128], index: 0, kind: input, shape index: {}]
  %s1 = inlined_call_operand.hbm [shape: f32[16,128], index: 1, kind: input, shape index: {}]
  %s2 = inlined_call_operand.hbm [shape: f32[8,128], index: 2, kind: output, shape index: {}]
  %s3 = sld [smem:[#allocation0]]
  $region38: #{tpu_custom_call.1} parent=0
    _
  %s5 = ssub.s32 1, %s3
  %s6 = scalar_select 0, %s5, %s3
  $region1: #{tpu_custom_call.1} parent=0
    #allocation2 [shape = 'u8[8192]{0}', space=vmem, size = 0x2000, scoped, tag = 'input window, operand 0, single buffered']
    #allocation3 [shape = 's32[1]{0}', space=sflag, size = 0x4, scoped, tag = 'scoped memory for tpu_custom_call.1']
    #allocation4 [shape = 's32[1]{0}', space=sflag, size = 0x4, scoped, tag = 'scoped memory for tpu_custom_call.1']
    #allocation5 [shape = 'u8[8192]{0}', space=vmem, size = 0x2000, scoped, tag = 'input window, operand 1, single buffered']
    #allocation6 [shape = 's32[1]{0}', space=sflag, size = 0x4, scoped, tag = 'scoped memory for tpu_custom_call.1']
    #allocation7 [shape = 'u8[4096]{0}', space=vmem, size = 0x1000, scoped, tag = 'output window, operand 0, single buffered']
    %7 = vsyncpa [#allocation3], 0
    %8 = vsyncpa [#allocation6], 0
    %9 = vsyncpa [#allocation4], 0
    // Predicated region
    $region2: #{tpu_custom_call.1} parent=1 // pred_check
      _
    $region3: #{tpu_custom_call.1} parent=1 // pred_check_branch
      %11 = sbr.rel (0) target = $region5
    $region4: #{tpu_custom_call.1} parent=1 // pred_region
      %s12 = sadd.s32 0, 0
      %p13 = scmp.lt.s32.totalorder %s12, 0
      %s14 = scalar_select %p13, %s12, 0
      %s15 = smul.u32 2, %s14
      %17 = vsyncadd [#allocation3], 0
      %s18 = smul.addr %s15, 8
      %s19 = scalar_lea.hbm %s0, %s18
      %s20 = sshll.u32 %s19, 4
      %s21 = int_to_ptr.hbm [resolvable:$true] %s20
      %s22 = sshll.u32 [#allocation2], 4
      %s23 = int_to_ptr.vmem [resolvable:$true] %s22
      %28 = dma.hbm_to_vmem [thread:$0]  %s21, 256, %s23, [#allocation3], 128, 128, 8
    $region5: #{tpu_custom_call.1} parent=1 // pred_fallthru
      _
    // Predicated region
    $region6: #{tpu_custom_call.1} parent=1 // pred_check
      _
    $region7: #{tpu_custom_call.1} parent=1 // pred_check_branch
      %30 = sbr.rel (0) target = $region9
    $region8: #{tpu_custom_call.1} parent=1 // pred_region
      %s31 = sadd.s32 0, 0
      %p32 = scmp.lt.s32.totalorder %s31, 0
      %s33 = scalar_select %p32, %s31, 0
      %s34 = smul.u32 2, %s33
      %36 = vsyncadd [#allocation6], 0
      %s37 = smul.addr %s34, 8
      %s38 = scalar_lea.hbm %s1, %s37
      %s39 = sshll.u32 %s38, 4
      %s40 = int_to_ptr.hbm [resolvable:$true] %s39
      %s41 = sshll.u32 [#allocation5], 4
      %s42 = int_to_ptr.vmem [resolvable:$true] %s41
      %47 = dma.hbm_to_vmem [thread:$0]  %s40, 256, %s42, [#allocation6], 128, 128, 8
    $region9: #{tpu_custom_call.1} parent=1 // pred_fallthru
      _
    // Predicated region
    $region10: #{tpu_custom_call.1} parent=1 // pred_check
      _
    $region11: #{tpu_custom_call.1} parent=1 // pred_check_branch
      %49 = sbr.rel (0) target = $region13
    $region12: #{tpu_custom_call.1} parent=1 // pred_region
      %51 = dma.done [#allocation3], 256
    $region13: #{tpu_custom_call.1} parent=1 // pred_fallthru
      _
    // Predicated region
    $region14: #{tpu_custom_call.1} parent=1 // pred_check
      _
    $region15: #{tpu_custom_call.1} parent=1 // pred_check_branch
      %53 = sbr.rel (0) target = $region17
    $region16: #{tpu_custom_call.1} parent=1 // pred_region
      %55 = dma.done [#allocation6], 256
    $region17: #{tpu_custom_call.1} parent=1 // pred_fallthru
      _
    %s56 = sadd.s32 0, 0
    %p57 = scmp.lt.s32.totalorder %s56, 0
    %s58 = scalar_select %p57, %s56, 0
    %s59 = smul.u32 2, %s58
    %s60 = sadd.s32 0, 0
    %p61 = scmp.lt.s32.totalorder %s60, 0
    %s62 = scalar_select %p61, %s60, 0
    %s63 = smul.u32 2, %s62
    %p64 = scmp.eq.s32.totalorder 0, 0
    // Predicated region
    $region18: #{tpu_custom_call.1} parent=1 // pred_check
      %p65 = pneg %p64
    $region19: #{tpu_custom_call.1} parent=1 // pred_check_branch
      %67 = sbr.rel (%p65) target = $region21
    $region20: #{tpu_custom_call.1} parent=1 // pred_region
      %68 = vst [vmem:[#allocation7] sm:$0xff] 0.0
    $region21: #{tpu_custom_call.1} parent=1 // pred_fallthru
      _
    %s69 = sadd.s32 0, 0
    %s70 = smul.u32 %s69, 16
    %s71 = ssub.s32 16, %s70
    %p72 = scmp.ge.s32.totalorder %s71, 16
    // Predicated region
    $region22: #{tpu_custom_call.1} parent=1 // pred_check
      %p73 = pneg %p72
    $region23: #{tpu_custom_call.1} parent=1 // pred_check_branch
      %75 = sbr.rel (%p73) target = $region25
    $region24: #{tpu_custom_call.1} parent=1 // pred_region
      %v76 = vld [vmem:[#allocation2] sm:$0xff]
      %v77 = vld [vmem:[#allocation2 + $0x8] sm:$0xff]
      %v78 = vld [vmem:[#allocation5] sm:$0xff]
      %v79 = vld [vmem:[#allocation5 + $0x8] sm:$0xff]
      %v80 = vmax.f32 %v76, 0.0
      %v81 = vmax.f32 %v77, 0.0
      %v82 = vmin.f32 %v80, 0.999
      %v83 = vmin.f32 %v81, 0.999
      %v84 = vlog2.pop %v82
      %v85 = vmul.f32 %v84, 0.6931472
      %v86 = vlog2.pop %v83
      %v87 = vmul.f32 %v86, 0.6931472
      %v88 = vmax.f32 %v85, -100.0
      %v89 = vmax.f32 %v87, -100.0
      %v90 = vsub.f32 1.0, %v82
      %v91 = vsub.f32 1.0, %v83
      %v92 = vlog2.pop %v90
      %v93 = vmul.f32 %v92, 0.6931472
      %v94 = vlog2.pop %v91
      %v95 = vmul.f32 %v94, 0.6931472
      %v96 = vmul.f32 %v78, 0.9
      %v97 = vmul.f32 %v79, 0.9
      %v98 = vadd.f32 %v96, 0.05
      %v99 = vadd.f32 %v97, 0.05
      %v100 = vsub.f32 %v88, %v93
      %v101 = vsub.f32 %v89, %v95
      %v102 = vmul.f32 %v98, %v100
      %v103 = vmul.f32 %v99, %v101
      %v104 = vadd.f32 %v102, %v93
      %v105 = vadd.f32 %v103, %v95
      %v106 = vmul.f32 %v78, 1.5
      %v107 = vmul.f32 %v79, 1.5
      %v108 = vadd.f32 %v106, 0.5
      %v109 = vadd.f32 %v107, 0.5
      %v110 = vmul.f32 %v108, %v104
      %v111 = vmul.f32 %v109, %v105
      %v112 = vld [vmem:[#allocation7] sm:$0xff]
      %v113 = vadd.f32 %v110, %v111
      %v114 = vadd.f32 %v112, %v113
      %115 = vst [vmem:[#allocation7] sm:$0xff] %v114
    $region25: #{tpu_custom_call.1} parent=1 // pred_fallthru
      _
    %p116 = scmp.lt.s32.totalorder %s71, 16
    // Predicated region
    $region26: #{tpu_custom_call.1} parent=1 // pred_check
      %p117 = pneg %p116
    $region27: #{tpu_custom_call.1} parent=1 // pred_check_branch
      %119 = sbr.rel (%p117) target = $region29
    $region28: #{tpu_custom_call.1} parent=1 // pred_region
      %v120 = vld [vmem:[#allocation2] sm:$0xff]
      %v121 = vld [vmem:[#allocation2 + $0x8] sm:$0xff]
      %v122 = vld [vmem:[#allocation5] sm:$0xff]
      %v123 = vld [vmem:[#allocation5 + $0x8] sm:$0xff]
      %v124 = vmax.f32 %v120, 0.0
      %v125 = vmax.f32 %v121, 0.0
      %v126 = vmin.f32 %v124, 0.999
      %v127 = vmin.f32 %v125, 0.999
      %v128 = vlog2.pop %v126
      %v129 = vmul.f32 %v128, 0.6931472
      %v130 = vlog2.pop %v127
      %v131 = vmul.f32 %v130, 0.6931472
      %v132 = vmax.f32 %v129, -100.0
      %v133 = vmax.f32 %v131, -100.0
      %v134 = vsub.f32 1.0, %v126
      %v135 = vsub.f32 1.0, %v127
      %v136 = vlog2.pop %v134
      %v137 = vmul.f32 %v136, 0.6931472
      %v138 = vlog2.pop %v135
      %v139 = vmul.f32 %v138, 0.6931472
      %v140 = vmul.f32 %v122, 0.9
      %v141 = vmul.f32 %v123, 0.9
      %v142 = vadd.f32 %v140, 0.05
      %v143 = vadd.f32 %v141, 0.05
      %v144 = vsub.f32 %v132, %v137
      %v145 = vsub.f32 %v133, %v139
      %v146 = vmul.f32 %v142, %v144
      %v147 = vmul.f32 %v143, %v145
      %v148 = vadd.f32 %v146, %v137
      %v149 = vadd.f32 %v147, %v139
      %v150 = vmul.f32 %v122, 1.5
      %v151 = vmul.f32 %v123, 1.5
      %v152 = vadd.f32 %v150, 0.5
      %v153 = vadd.f32 %v151, 0.5
      %v154 = vmul.f32 %v152, %v148
      %v155 = vmul.f32 %v153, %v149
      %v156 = vlaneseq
      %v157 = vshrl.u32 %v156, 7
      %v158 = vadd.s32 %v157, 8
      %v159 = vstv %s71
      %vm160 = vcmp.lt.s32.totalorder %v157, %v159
      %vm161 = vcmp.lt.s32.totalorder %v158, %v159
      %v162 = vsel %vm160, %v154, 0.0
      %v163 = vsel %vm161, %v155, 0.0
      %v164 = vld [vmem:[#allocation7] sm:$0xff]
      %v165 = vadd.f32 %v162, %v163
      %v166 = vadd.f32 %v164, %v165
      %167 = vst [vmem:[#allocation7] sm:$0xff] %v166
    $region29: #{tpu_custom_call.1} parent=1 // pred_fallthru
      _
    // Predicated region
    $region30: #{tpu_custom_call.1} parent=1 // pred_check
      _
    $region31: #{tpu_custom_call.1} parent=1 // pred_check_branch
      %169 = sbr.rel (0) target = $region33
    $region32: #{tpu_custom_call.1} parent=1 // pred_region
      %171 = vsyncadd [#allocation4], 0
      %s173 = sshll.u32 [#allocation7], 4
      %s174 = int_to_ptr.vmem [resolvable:$true] %s173
      %s175 = sshll.u32 %s2, 4
      %s176 = int_to_ptr.hbm [resolvable:$true] %s175
      %178 = dma.vmem_to_hbm [thread:$0]  %s174, 128, %s176, [#allocation4]
    $region33: #{tpu_custom_call.1} parent=1 // pred_fallthru
      _
    // Predicated region
    $region34: #{tpu_custom_call.1} parent=1 // pred_check
      _
    $region35: #{tpu_custom_call.1} parent=1 // pred_check_branch
      %180 = sbr.rel (0) target = $region37
    $region36: #{tpu_custom_call.1} parent=1 // pred_region
      %182 = dma.done [#allocation4], 128
    $region37: #{tpu_custom_call.1} parent=1 // pred_fallthru
      _
    %183 = vsyncpa [#allocation3], 1
    %184 = vsyncpa [#allocation6], 1
    %185 = vsyncpa [#allocation4], 1

</llo_original>
